<compile_context>
chip_gen: v5e
topology: v5e:2x2
jax: 0.10.0
libtpu: 0.0.40
codegen_flags: <defaults>
</compile_context>

<pallas_src>
import jax
import jax.numpy as jnp
from jax.experimental import pallas as pl
from jax.experimental.pallas import tpu as pltpu

LOG_STD_MIN = -20.0
LOG_STD_MAX = 2.0


def _round_up(x, m):
    return ((x + m - 1) // m) * m


def actor_kernel(state_ref, w1_ref, b1_ref, w2_ref, b2_ref, wh_ref, bh_ref,
                 eps_ref, action_ref, logp_ref):
    n_actions = action_ref.shape[-1]

    # ---- feature trunk: Linear -> ReLU -> Linear -> ReLU (bf16 MXU, f32 acc)
    x = state_ref[...].astype(jnp.bfloat16)
    h1 = jnp.dot(x, w1_ref[...], preferred_element_type=jnp.float32) + b1_ref[...]
    h1 = jnp.maximum(h1, 0.0)
    h2 = jnp.dot(h1.astype(jnp.bfloat16), w2_ref[...],
                 preferred_element_type=jnp.float32) + b2_ref[...]
    h2 = jnp.maximum(h2, 0.0)

    # ---- fused heads: one matmul producing [mu | log_std]
    heads = jnp.dot(h2.astype(jnp.bfloat16), wh_ref[...],
                    preferred_element_type=jnp.float32) + bh_ref[...]
    mu = heads[:, :n_actions]
    log_std = heads[:, n_actions:]

    log_std = jnp.clip(log_std, LOG_STD_MIN, LOG_STD_MAX)
    std = jnp.exp(log_std)

    # z = dist.rsample() = mu + std * eps  (reparameterized)
    eps = eps_ref[...]
    z = mu + std * eps

    # action = tanh(z)  (evaluate=False path)
    action = jnp.tanh(z)

    # Normal(mu, std).log_prob(z):  (z - mu)/std == eps algebraically.
    normal_lp = -0.5 * jnp.square(eps) - log_std - 0.5 * jnp.log(2.0 * jnp.pi)

    # tanh correction: log(1 - tanh(z)^2) = 2*(log2 - z - softplus(-2z)),
    # exact where the 1e-7-epsilon form saturates (|z| large).
    neg2z = -2.0 * z
    softplus = jnp.maximum(neg2z, 0.0) + jnp.log(1.0 + jnp.exp(-jnp.abs(neg2z)))
    log1m_tanh2 = 2.0 * (jnp.log(2.0) - z - softplus)

    log_prob = normal_lp - log1m_tanh2
    logp_ref[...] = jnp.sum(log_prob, axis=-1, keepdims=True)
    action_ref[...] = action


def actor_forward(state, params, eps, *, block_batch=512):
    batch, n_states = state.shape
    hidden = params["w1"].shape[1]
    n2 = params["wh"].shape[1]          # 2 * n_actions (fused heads)
    n_actions = n2 // 2

    # Batch tile: multiple of 8 sublanes; pad batch so the grid tiles evenly.
    tb = min(block_batch, _round_up(batch, 8))
    padded = _round_up(batch, tb)
    if padded != batch:
        state = jnp.pad(state, ((0, padded - batch), (0, 0)))
        eps = jnp.pad(eps, ((0, padded - batch), (0, 0)))
    grid = (padded // tb,)

    def tile(feat):
        return pl.BlockSpec((tb, feat), lambda i: (i, 0))

    def resident(rows, cols):
        # Constant block index -> stays resident in VMEM across grid steps.
        return pl.BlockSpec((rows, cols), lambda i: (0, 0))

    # VMEM budget: resident weights + double-buffered batch tiles + margin.
    w_bytes = 2 * (n_states * hidden + hidden * hidden + hidden * n2)   # bf16
    b_bytes = 4 * (hidden + hidden + n2)                                # f32
    io_tile = 4 * tb * (n_states + 2 * n_actions + 1)
    interm = 4 * tb * (2 * hidden + n2 + 8 * n_actions)
    vmem_bytes = int(min(max(2 * (w_bytes + b_bytes + io_tile) + interm + (2 << 20),
                             4 << 20), 64 << 20))

    flops = 2 * padded * (n_states * hidden + hidden * hidden + hidden * n2)
    transc = 4 * padded * n_actions
    bytes_accessed = (4 * padded * (n_states + 2 * n_actions + 1)
                      + w_bytes + b_bytes)

    action, logp = pl.pallas_call(
        actor_kernel,
        out_shape=(
            jax.ShapeDtypeStruct((padded, n_actions), jnp.float32),  # action
            jax.ShapeDtypeStruct((padded, 1), jnp.float32),          # log_prob
        ),
        grid=grid,
        in_specs=[
            tile(n_states),               # state      (batch tile)
            resident(n_states, hidden),   # w1  (bf16)
            resident(1, hidden),          # b1  (f32)
            resident(hidden, hidden),     # w2  (bf16)
            resident(1, hidden),          # b2  (f32)
            resident(hidden, n2),         # wh  (bf16)  [mu | log_std]
            resident(1, n2),              # bh  (f32)
            tile(n_actions),              # eps        (batch tile)
        ],
        out_specs=(
            pl.BlockSpec((tb, n_actions), lambda i: (i, 0)),
            pl.BlockSpec((tb, 1), lambda i: (i, 0)),
        ),
        compiler_params=pltpu.CompilerParams(
            dimension_semantics=("parallel",),
            vmem_limit_bytes=vmem_bytes,
        ),
        cost_estimate=pl.CostEstimate(
            flops=flops, transcendentals=transc, bytes_accessed=bytes_accessed),
    )(state,
      params["w1"], params["b1"],
      params["w2"], params["b2"],
      params["wh"], params["bh"],
      eps)

    return action[:batch], logp[:batch]


def init_params(key, n_states, hidden, n_actions):
    ks = jax.random.split(key, 8)

    def lin(kw, kb, fan_in, fan_out):
        # PyTorch-like uniform init, bound 1/sqrt(fan_in); weights stored
        # transposed (in, out) so the kernel computes y = x @ W + b.
        bound = 1.0 / jnp.sqrt(jnp.float32(fan_in))
        w = jax.random.uniform(kw, (fan_in, fan_out), jnp.float32, -bound, bound)
        b = jax.random.uniform(kb, (1, fan_out), jnp.float32, -bound, bound)
        return w, b

    w1, b1 = lin(ks[0], ks[1], n_states, hidden)
    w2, b2 = lin(ks[2], ks[3], hidden, hidden)
    wmu, bmu = lin(ks[4], ks[5], hidden, n_actions)
    wls, bls = lin(ks[6], ks[7], hidden, n_actions)

    # Fuse mu / log_std heads into one matmul; MXU operands in bf16,
    # biases stay f32 (bias add + elementwise math run in f32).
    return dict(
        w1=w1.astype(jnp.bfloat16), b1=b1,
        w2=w2.astype(jnp.bfloat16), b2=b2,
        wh=jnp.concatenate([wmu, wls], axis=1).astype(jnp.bfloat16),
        bh=jnp.concatenate([bmu, bls], axis=1),
    )


if __name__ == "__main__":
    batch, n_states, hidden, n_actions = 4, 16, 32, 8

    key = jax.random.PRNGKey(0)
    k_param, k_state, k_eps = jax.random.split(key, 3)

    params = init_params(k_param, n_states, hidden, n_actions)
    state = jax.random.normal(k_state, (batch, n_states), jnp.float32)
    eps = jax.random.normal(k_eps, (batch, n_actions), jnp.float32)

    action, log_prob = actor_forward(state, params, eps)
    jax.block_until_ready((action, log_prob))

    assert action.shape == (batch, n_actions)
    assert log_prob.shape == (batch, 1)
    assert bool(jnp.all(jnp.isfinite(action)))
    assert bool(jnp.all(jnp.isfinite(log_prob)))
    print("KERNEL_OK")
</pallas_src>

<mosaic_0001>
module attributes {stable_mosaic.version = 11 : i64} {
  func.func @actor_kernel(%arg0: i32, %arg1: memref<8x16xf32, #tpu.memory_space<vmem>>, %arg2: memref<16x32xbf16, #tpu.memory_space<vmem>>, %arg3: memref<1x32xf32, #tpu.memory_space<vmem>>, %arg4: memref<32x32xbf16, #tpu.memory_space<vmem>>, %arg5: memref<1x32xf32, #tpu.memory_space<vmem>>, %arg6: memref<32x16xbf16, #tpu.memory_space<vmem>>, %arg7: memref<1x16xf32, #tpu.memory_space<vmem>>, %arg8: memref<8x8xf32, #tpu.memory_space<vmem>>, %arg9: memref<8x8xf32, #tpu.memory_space<vmem>>, %arg10: memref<8x1xf32, #tpu.memory_space<vmem>>) attributes {dimension_semantics = [#tpu.dimension_semantics<parallel>], iteration_bounds = array<i64: 1>, scalar_prefetch = 0 : i64, scratch_operands = 0 : i64, tpu.core_type = #tpu.core_type<tc>, window_params = [{transform_indices = @transform_0, window_bounds = array<i64: 8, 16>}, {pipeline_mode = #tpu.pipeline_mode<synchronous>, transform_indices = @transform_1, window_bounds = array<i64: 16, 32>}, {pipeline_mode = #tpu.pipeline_mode<synchronous>, transform_indices = @transform_2, window_bounds = array<i64: 1, 32>}, {pipeline_mode = #tpu.pipeline_mode<synchronous>, transform_indices = @transform_3, window_bounds = array<i64: 32, 32>}, {pipeline_mode = #tpu.pipeline_mode<synchronous>, transform_indices = @transform_4, window_bounds = array<i64: 1, 32>}, {pipeline_mode = #tpu.pipeline_mode<synchronous>, transform_indices = @transform_5, window_bounds = array<i64: 32, 16>}, {pipeline_mode = #tpu.pipeline_mode<synchronous>, transform_indices = @transform_6, window_bounds = array<i64: 1, 16>}, {transform_indices = @transform_7, window_bounds = array<i64: 8, 8>}, {transform_indices = @transform_8, window_bounds = array<i64: 8, 8>}, {transform_indices = @transform_9, window_bounds = array<i64: 8, 1>}]} {
    %c0 = arith.constant 0 : index
    %c0_0 = arith.constant 0 : index
    %0 = vector.load %arg1[%c0, %c0_0] : memref<8x16xf32, #tpu.memory_space<vmem>>, vector<8x16xf32>
    %1 = arith.truncf %0 : vector<8x16xf32> to vector<8x16xbf16>
    %c0_1 = arith.constant 0 : index
    %c0_2 = arith.constant 0 : index
    %2 = vector.load %arg2[%c0_1, %c0_2] : memref<16x32xbf16, #tpu.memory_space<vmem>>, vector<16x32xbf16>
    %cst = arith.constant dense<0.000000e+00> : vector<8x32xf32>
    %3 = tpu.matmul %1, %2, %cst {dimension_numbers = #tpu.dot_dimension_numbers<[1], [0], [0], [1], [0, 0, 1, 1], [], []>} : vector<8x16xbf16>, vector<16x32xbf16>, vector<8x32xf32> -> vector<8x32xf32>
    %c0_3 = arith.constant 0 : index
    %c0_4 = arith.constant 0 : index
    %4 = vector.load %arg3[%c0_3, %c0_4] : memref<1x32xf32, #tpu.memory_space<vmem>>, vector<1x32xf32>
    %5 = vector.broadcast %4 : vector<1x32xf32> to vector<8x32xf32>
    %6 = arith.addf %3, %5 : vector<8x32xf32>
    %cst_5 = arith.constant 0.000000e+00 : f32
    %7 = vector.broadcast %cst_5 : f32 to vector<8x32xf32>
    %8 = arith.maximumf %6, %7 : vector<8x32xf32>
    %9 = arith.truncf %8 : vector<8x32xf32> to vector<8x32xbf16>
    %c0_6 = arith.constant 0 : index
    %c0_7 = arith.constant 0 : index
    %10 = vector.load %arg4[%c0_6, %c0_7] : memref<32x32xbf16, #tpu.memory_space<vmem>>, vector<32x32xbf16>
    %cst_8 = arith.constant dense<0.000000e+00> : vector<8x32xf32>
    %11 = tpu.matmul %9, %10, %cst_8 {dimension_numbers = #tpu.dot_dimension_numbers<[1], [0], [0], [1], [0, 0, 1, 1], [], []>} : vector<8x32xbf16>, vector<32x32xbf16>, vector<8x32xf32> -> vector<8x32xf32>
    %c0_9 = arith.constant 0 : index
    %c0_10 = arith.constant 0 : index
    %12 = vector.load %arg5[%c0_9, %c0_10] : memref<1x32xf32, #tpu.memory_space<vmem>>, vector<1x32xf32>
    %13 = vector.broadcast %12 : vector<1x32xf32> to vector<8x32xf32>
    %14 = arith.addf %11, %13 : vector<8x32xf32>
    %cst_11 = arith.constant 0.000000e+00 : f32
    %15 = vector.broadcast %cst_11 : f32 to vector<8x32xf32>
    %16 = arith.maximumf %14, %15 : vector<8x32xf32>
    %17 = arith.truncf %16 : vector<8x32xf32> to vector<8x32xbf16>
    %c0_12 = arith.constant 0 : index
    %c0_13 = arith.constant 0 : index
    %18 = vector.load %arg6[%c0_12, %c0_13] : memref<32x16xbf16, #tpu.memory_space<vmem>>, vector<32x16xbf16>
    %cst_14 = arith.constant dense<0.000000e+00> : vector<8x16xf32>
    %19 = tpu.matmul %17, %18, %cst_14 {dimension_numbers = #tpu.dot_dimension_numbers<[1], [0], [0], [1], [0, 0, 1, 1], [], []>} : vector<8x32xbf16>, vector<32x16xbf16>, vector<8x16xf32> -> vector<8x16xf32>
    %c0_15 = arith.constant 0 : index
    %c0_16 = arith.constant 0 : index
    %20 = vector.load %arg7[%c0_15, %c0_16] : memref<1x16xf32, #tpu.memory_space<vmem>>, vector<1x16xf32>
    %21 = vector.broadcast %20 : vector<1x16xf32> to vector<8x16xf32>
    %22 = arith.addf %19, %21 : vector<8x16xf32>
    %23 = vector.extract_strided_slice %22 {offsets = [0, 0], sizes = [8, 8], strides = [1, 1]} : vector<8x16xf32> to vector<8x8xf32>
    %24 = vector.extract_strided_slice %22 {offsets = [0, 8], sizes = [8, 8], strides = [1, 1]} : vector<8x16xf32> to vector<8x8xf32>
    %cst_17 = arith.constant -2.000000e+01 : f32
    %cst_18 = arith.constant 2.000000e+00 : f32
    %25 = vector.broadcast %cst_17 : f32 to vector<8x8xf32>
    %26 = arith.maximumf %25, %24 : vector<8x8xf32>
    %27 = vector.broadcast %cst_18 : f32 to vector<8x8xf32>
    %28 = arith.minimumf %27, %26 : vector<8x8xf32>
    %29 = math.exp %28 : vector<8x8xf32>
    %c0_19 = arith.constant 0 : index
    %c0_20 = arith.constant 0 : index
    %30 = vector.load %arg8[%c0_19, %c0_20] : memref<8x8xf32, #tpu.memory_space<vmem>>, vector<8x8xf32>
    %31 = arith.mulf %29, %30 : vector<8x8xf32>
    %32 = arith.addf %23, %31 : vector<8x8xf32>
    %33 = math.tanh %32 : vector<8x8xf32>
    %34 = arith.mulf %30, %30 : vector<8x8xf32>
    %cst_21 = arith.constant -5.000000e-01 : f32
    %35 = vector.broadcast %cst_21 : f32 to vector<8x8xf32>
    %36 = arith.mulf %35, %34 : vector<8x8xf32>
    %37 = arith.subf %36, %28 : vector<8x8xf32>
    %cst_22 = arith.constant 6.28318548 : f32
    %38 = math.log %cst_22 : f32
    %cst_23 = arith.constant 5.000000e-01 : f32
    %39 = arith.mulf %cst_23, %38 : f32
    %40 = vector.broadcast %39 : f32 to vector<8x8xf32>
    %41 = arith.subf %37, %40 : vector<8x8xf32>
    %cst_24 = arith.constant -2.000000e+00 : f32
    %42 = vector.broadcast %cst_24 : f32 to vector<8x8xf32>
    %43 = arith.mulf %42, %32 : vector<8x8xf32>
    %cst_25 = arith.constant 0.000000e+00 : f32
    %44 = vector.broadcast %cst_25 : f32 to vector<8x8xf32>
    %45 = arith.maximumf %43, %44 : vector<8x8xf32>
    %46 = math.absf %43 : vector<8x8xf32>
    %cst_26 = arith.constant 0.000000e+00 : f32
    %47 = vector.broadcast %cst_26 : f32 to vector<8x8xf32>
    %48 = arith.subf %47, %46 : vector<8x8xf32>
    %49 = math.exp %48 : vector<8x8xf32>
    %cst_27 = arith.constant 1.000000e+00 : f32
    %50 = vector.broadcast %cst_27 : f32 to vector<8x8xf32>
    %51 = arith.addf %50, %49 : vector<8x8xf32>
    %52 = math.log %51 : vector<8x8xf32>
    %53 = arith.addf %45, %52 : vector<8x8xf32>
    %cst_28 = arith.constant 2.000000e+00 : f32
    %54 = math.log %cst_28 : f32
    %55 = vector.broadcast %54 : f32 to vector<8x8xf32>
    %56 = arith.subf %55, %32 : vector<8x8xf32>
    %57 = arith.subf %56, %53 : vector<8x8xf32>
    %cst_29 = arith.constant 2.000000e+00 : f32
    %58 = vector.broadcast %cst_29 : f32 to vector<8x8xf32>
    %59 = arith.mulf %58, %57 : vector<8x8xf32>
    %60 = arith.subf %41, %59 : vector<8x8xf32>
    %cst_30 = arith.constant dense<0.000000e+00> : vector<8xf32>
    %61 = vector.multi_reduction <add>, %60, %cst_30 [1] : vector<8x8xf32> to vector<8xf32>
    %62 = vector.shape_cast %61 : vector<8xf32> to vector<8x1xf32>
    %c0_31 = arith.constant 0 : index
    %c0_32 = arith.constant 0 : index
    %63 = vector.load %arg10[%c0_31, %c0_32] : memref<8x1xf32, #tpu.memory_space<vmem>>, vector<8x1xf32>
    tpu.vector_store %arg10[%c0_31, %c0_32], %62 {strides = array<i32>} : memref<8x1xf32, #tpu.memory_space<vmem>>, vector<8x1xf32>,
    %c0_33 = arith.constant 0 : index
    %c0_34 = arith.constant 0 : index
    %64 = vector.load %arg9[%c0_33, %c0_34] : memref<8x8xf32, #tpu.memory_space<vmem>>, vector<8x8xf32>
    tpu.vector_store %arg9[%c0_33, %c0_34], %33 {strides = array<i32>} : memref<8x8xf32, #tpu.memory_space<vmem>>, vector<8x8xf32>,
    return
  }
  func.func @transform_0(%arg0: i32) -> (i32, i32) {
    %c0_i32 = arith.constant 0 : i32
    %c0_i32_0 = arith.constant 0 : i32
    return %arg0, %c0_i32 : i32, i32
  }
  func.func @transform_1(%arg0: i32) -> (i32, i32) {
    %c0_i32 = arith.constant 0 : i32
    %c0_i32_0 = arith.constant 0 : i32
    %c0_i32_1 = arith.constant 0 : i32
    return %c0_i32, %c0_i32_0 : i32, i32
  }
  func.func @transform_2(%arg0: i32) -> (i32, i32) {
    %c0_i32 = arith.constant 0 : i32
    %c0_i32_0 = arith.constant 0 : i32
    %c0_i32_1 = arith.constant 0 : i32
    return %c0_i32, %c0_i32_0 : i32, i32
  }
  func.func @transform_3(%arg0: i32) -> (i32, i32) {
    %c0_i32 = arith.constant 0 : i32
    %c0_i32_0 = arith.constant 0 : i32
    %c0_i32_1 = arith.constant 0 : i32
    return %c0_i32, %c0_i32_0 : i32, i32
  }
  func.func @transform_4(%arg0: i32) -> (i32, i32) {
    %c0_i32 = arith.constant 0 : i32
    %c0_i32_0 = arith.constant 0 : i32
    %c0_i32_1 = arith.constant 0 : i32
    return %c0_i32, %c0_i32_0 : i32, i32
  }
  func.func @transform_5(%arg0: i32) -> (i32, i32) {
    %c0_i32 = arith.constant 0 : i32
    %c0_i32_0 = arith.constant 0 : i32
    %c0_i32_1 = arith.constant 0 : i32
    return %c0_i32, %c0_i32_0 : i32, i32
  }
  func.func @transform_6(%arg0: i32) -> (i32, i32) {
    %c0_i32 = arith.constant 0 : i32
    %c0_i32_0 = arith.constant 0 : i32
    %c0_i32_1 = arith.constant 0 : i32
    return %c0_i32, %c0_i32_0 : i32, i32
  }
  func.func @transform_7(%arg0: i32) -> (i32, i32) {
    %c0_i32 = arith.constant 0 : i32
    %c0_i32_0 = arith.constant 0 : i32
    return %arg0, %c0_i32 : i32, i32
  }
  func.func @transform_8(%arg0: i32) -> (i32, i32) {
    %c0_i32 = arith.constant 0 : i32
    %c0_i32_0 = arith.constant 0 : i32
    return %arg0, %c0_i32 : i32, i32
  }
  func.func @transform_9(%arg0: i32) -> (i32, i32) {
    %c0_i32 = arith.constant 0 : i32
    %c0_i32_0 = arith.constant 0 : i32
    return %arg0, %c0_i32 : i32, i32
  }
}

</mosaic_0001>

<llo_original>
// kernel: tpu_custom_call.1
$region0: #{tpu_custom_call.1}
  #allocation0 [shape = 'u32[]', space=smem, size = 0x4, offset = 0x4, fixed_abs, tag = 'smem constant byte address 0x4 - core index']
  #allocation1 [shape = 'u32[72,128]{1,0:T(1,128)}', space=vmem, size = 0x9000, scoped, tag = 'internal scratch']
  %s0 = inlined_call_operand.vmem [shape: f32[8,16], index: 0, kind: input, shape index: {}]
  %s1 = inlined_call_operand.hbm [shape: bf16[16,32], index: 1, kind: input, shape index: {}]
  %s2 = inlined_call_operand.vmem [shape: f32[1,32], index: 2, kind: input, shape index: {}]
  %s3 = inlined_call_operand.vmem [shape: bf16[32,32], index: 3, kind: input, shape index: {}]
  %s4 = inlined_call_operand.vmem [shape: f32[1,32], index: 4, kind: input, shape index: {}]
  %s5 = inlined_call_operand.vmem [shape: bf16[32,16], index: 5, kind: input, shape index: {}]
  %s6 = inlined_call_operand.vmem [shape: f32[1,16], index: 6, kind: input, shape index: {}]
  %s7 = inlined_call_operand.hbm [shape: f32[8,8], index: 7, kind: input, shape index: {}]
  %s8 = inlined_call_operand.hbm [shape: f32[8,8], index: 8, kind: output, shape index: {0}]
  %s9 = inlined_call_operand.vmem [shape: f32[8,1], index: 9, kind: output, shape index: {1}]
  %10 = xla_tuple %s8, %s9
  %s11 = sld [smem:[#allocation0]]
  $region58: #{tpu_custom_call.1} parent=0
    _
  %s13 = ssub.s32 1, %s11
  %s14 = scalar_select 0, %s13, %s11
  $region1: #{tpu_custom_call.1} parent=0
    #allocation2 [shape = 'u8[4096]{0}', space=vmem, size = 0x1000, scoped, tag = 'input window, operand 1, single buffered']
    #allocation3 [shape = 's32[1]{0}', space=sflag, size = 0x4, scoped, tag = 'scoped memory for tpu_custom_call.1']
    #allocation4 [shape = 's32[1]{0}', space=sflag, size = 0x4, scoped, tag = 'scoped memory for tpu_custom_call.1']
    #allocation5 [shape = 'u8[4096]{0}', space=vmem, size = 0x1000, scoped, tag = 'input window, operand 7, single buffered']
    #allocation6 [shape = 's32[1]{0}', space=sflag, size = 0x4, scoped, tag = 'scoped memory for tpu_custom_call.1']
    #allocation7 [shape = 'u8[4096]{0}', space=vmem, size = 0x1000, scoped, tag = 'output window, operand 0, single buffered']
    %15 = vsyncpa [#allocation3], 0
    %16 = vsyncpa [#allocation6], 0
    %17 = vsyncpa [#allocation4], 0
    // Predicated region
    $region2: #{tpu_custom_call.1} parent=1 // pred_check
      _
    $region3: #{tpu_custom_call.1} parent=1 // pred_check_branch
      %19 = sbr.rel (0) target = $region5
    $region4: #{tpu_custom_call.1} parent=1 // pred_region
      _
    $region5: #{tpu_custom_call.1} parent=1 // pred_fallthru
      _
    // Predicated region
    $region6: #{tpu_custom_call.1} parent=1 // pred_check
      _
    $region7: #{tpu_custom_call.1} parent=1 // pred_check_branch
      %21 = sbr.rel (0) target = $region9
    $region8: #{tpu_custom_call.1} parent=1 // pred_region
      %23 = vsyncadd [#allocation3], 0
      %s24 = sshll.u32 %s1, 4
      %s25 = int_to_ptr.hbm [resolvable:$true] %s24
      %s26 = sshll.u32 [#allocation2], 4
      %s27 = int_to_ptr.vmem [resolvable:$true] %s26
      %32 = dma.hbm_to_vmem [thread:$0]  %s25, 128, %s27, [#allocation3], 64, 64, 4
    $region9: #{tpu_custom_call.1} parent=1 // pred_fallthru
      _
    // Predicated region
    $region10: #{tpu_custom_call.1} parent=1 // pred_check
      _
    $region11: #{tpu_custom_call.1} parent=1 // pred_check_branch
      %34 = sbr.rel (0) target = $region13
    $region12: #{tpu_custom_call.1} parent=1 // pred_region
      _
    $region13: #{tpu_custom_call.1} parent=1 // pred_fallthru
      _
    // Predicated region
    $region14: #{tpu_custom_call.1} parent=1 // pred_check
      _
    $region15: #{tpu_custom_call.1} parent=1 // pred_check_branch
      %36 = sbr.rel (0) target = $region17
    $region16: #{tpu_custom_call.1} parent=1 // pred_region
      _
    $region17: #{tpu_custom_call.1} parent=1 // pred_fallthru
      _
    // Predicated region
    $region18: #{tpu_custom_call.1} parent=1 // pred_check
      _
    $region19: #{tpu_custom_call.1} parent=1 // pred_check_branch
      %38 = sbr.rel (0) target = $region21
    $region20: #{tpu_custom_call.1} parent=1 // pred_region
      _
    $region21: #{tpu_custom_call.1} parent=1 // pred_fallthru
      _
    // Predicated region
    $region22: #{tpu_custom_call.1} parent=1 // pred_check
      _
    $region23: #{tpu_custom_call.1} parent=1 // pred_check_branch
      %40 = sbr.rel (0) target = $region25
    $region24: #{tpu_custom_call.1} parent=1 // pred_region
      _
    $region25: #{tpu_custom_call.1} parent=1 // pred_fallthru
      _
    // Predicated region
    $region26: #{tpu_custom_call.1} parent=1 // pred_check
      _
    $region27: #{tpu_custom_call.1} parent=1 // pred_check_branch
      %42 = sbr.rel (0) target = $region29
    $region28: #{tpu_custom_call.1} parent=1 // pred_region
      _
    $region29: #{tpu_custom_call.1} parent=1 // pred_fallthru
      _
    // Predicated region
    $region30: #{tpu_custom_call.1} parent=1 // pred_check
      _
    $region31: #{tpu_custom_call.1} parent=1 // pred_check_branch
      %44 = sbr.rel (0) target = $region33
    $region32: #{tpu_custom_call.1} parent=1 // pred_region
      %46 = vsyncadd [#allocation6], 0
      %s48 = sshll.u32 %s7, 4
      %s49 = int_to_ptr.hbm [resolvable:$true] %s48
      %s50 = sshll.u32 [#allocation5], 4
      %s51 = int_to_ptr.vmem [resolvable:$true] %s50
      %53 = dma.hbm_to_vmem [thread:$0]  %s49, 128, %s51, [#allocation6]
    $region33: #{tpu_custom_call.1} parent=1 // pred_fallthru
      _
    // Predicated region
    $region34: #{tpu_custom_call.1} parent=1 // pred_check
      _
    $region35: #{tpu_custom_call.1} parent=1 // pred_check_branch
      %55 = sbr.rel (0) target = $region37
    $region36: #{tpu_custom_call.1} parent=1 // pred_region
      %57 = dma.done [#allocation3], 128
    $region37: #{tpu_custom_call.1} parent=1 // pred_fallthru
      _
    // Predicated region
    $region38: #{tpu_custom_call.1} parent=1 // pred_check
      _
    $region39: #{tpu_custom_call.1} parent=1 // pred_check_branch
      %59 = sbr.rel (0) target = $region41
    $region40: #{tpu_custom_call.1} parent=1 // pred_region
      %61 = dma.done [#allocation6], 128
    $region41: #{tpu_custom_call.1} parent=1 // pred_fallthru
      _
    %v63 = vld [vmem:[%s0] sm:$0xff]
    %v64 = vpack.c.bf16 %v63, %v63
    %v65 = vld [vmem:[#allocation2] sm:$0xf]
    %v66 = vld [vmem:[#allocation2 + $0x4] sm:$0xf]
    %v67 = vld [vmem:[%s2] sm:$0x1]
    %v69 = vperm.slane %v67, 0
    %v73 = vunpack.c.l.b16 %v65
    %v74 = vunpack.c.l.b16 %v66
    %v75 = vpack.c.b16 %v74, %v73
    %vm77 = vcmask 130048
    %v79 = vsel %vm77, %v64, 0
    %81 = vmatpush.bf16.msra.mxu0 0
    %82 = vmatpush.bf16.msra.mxu0 0
    %83 = vmatpush.bf16.msra.mxu0 0
    %84 = vmatpush.bf16.msra.mxu0 0
    %85 = vmatpush.bf16.msra.mxu0 0
    %86 = vmatpush.bf16.msra.mxu0 0
    %87 = vmatpush.bf16.msra.mxu0 0
    %88 = vmatpush.bf16.msra.mxu0 %v75
    %89 = vmatmul.bf16.gmra.mxu0 %v79
    %v90 = vpop.f32.mrf.mxu0
    %v91 = vadd.f32 %v69, %v90
    %v92 = vpop.f32.mrf.mxu0
    %93 = vdwg.mxu0
    %v94 = vmax.f32 %v91, 0.0
    %v95 = vpack.c.bf16 %v94, %v94
    %v96 = vld [vmem:[%s3] sm:$0xf]
    %v97 = vld [vmem:[%s3 + $0x4] sm:$0xf]
    %v98 = vld [vmem:[%s3 + $0x8] sm:$0xf]
    %v99 = vld [vmem:[%s3 + $0xc] sm:$0xf]
    %v100 = vld [vmem:[%s4] sm:$0x1]
    %v102 = vperm.slane %v100, 0
    %v108 = vunpack.c.l.b16 %v96
    %v109 = vunpack.c.l.b16 %v97
    %v110 = vunpack.c.l.b16 %v98
    %v111 = vunpack.c.l.b16 %v99
    %v112 = vpack.c.b16 %v109, %v108
    %v113 = vpack.c.b16 %v111, %v110
    %vm116 = vcmask 261120
    %v118 = vsel %vm116, %v95, 0
    %120 = vmatpush.bf16.msra.mxu0 0
    %121 = vmatpush.bf16.msra.mxu0 0
    %122 = vmatpush.bf16.msra.mxu0 0
    %123 = vmatpush.bf16.msra.mxu0 0
    %124 = vmatpush.bf16.msra.mxu0 0
    %125 = vmatpush.bf16.msra.mxu0 0
    %126 = vmatpush.bf16.msra.mxu0 %v113
    %127 = vmatpush.bf16.msra.mxu0 %v112
    %128 = vmatmul.bf16.gmra.mxu0 %v118
    %v129 = vpop.f32.mrf.mxu0
    %v130 = vadd.f32 %v102, %v129
    %v131 = vpop.f32.mrf.mxu0
    %132 = vdwg.mxu0
    %v133 = vmax.f32 %v130, 0.0
    %v134 = vpack.c.bf16 %v133, %v133
    %v135 = vld [vmem:[%s5] sm:$0xf]
    %v136 = vld [vmem:[%s5 + $0x4] sm:$0xf]
    %v137 = vld [vmem:[%s5 + $0x8] sm:$0xf]
    %v138 = vld [vmem:[%s5 + $0xc] sm:$0xf]
    %v139 = vld [vmem:[%s6] sm:$0x1]
    %v141 = vperm.slane %v139, 0
    %v147 = vunpack.c.l.b16 %v135
    %v148 = vunpack.c.l.b16 %v136
    %v149 = vunpack.c.l.b16 %v137
    %v150 = vunpack.c.l.b16 %v138
    %v151 = vpack.c.b16 %v148, %v147
    %v152 = vpack.c.b16 %v150, %v149
    %v156 = vsel %vm116, %v134, 0
    %158 = vmatpush.bf16.msra.mxu0 0
    %159 = vmatpush.bf16.msra.mxu0 0
    %160 = vmatpush.bf16.msra.mxu0 0
    %161 = vmatpush.bf16.msra.mxu0 0
    %162 = vmatpush.bf16.msra.mxu0 0
    %163 = vmatpush.bf16.msra.mxu0 0
    %164 = vmatpush.bf16.msra.mxu0 %v152
    %165 = vmatpush.bf16.msra.mxu0 %v151
    %166 = vmatmul.bf16.gmra.mxu0 %v156
    %v167 = vpop.f32.mrf.mxu0
    %v168 = vadd.f32 %v141, %v167
    %v169 = vpop.f32.mrf.mxu0
    %170 = vdwg.mxu0
    %v171 = vmax.f32 %v168, -20.0
    %v172 = vmin.f32 %v171, 2.0
    %v173 = vmul.f32 %v172, 1.442695
    %v174 = vpow.pop %v173
    %v175 = vld [vmem:[#allocation5] sm:$0xff]
    %177 = vrot.lane.b32.xlu0 %v175, 8
    %v178 = vpop.permute.xlu0 %177
    %v180 = vmul.f32 %v174, %v178
    %182 = vrot.lane.b32.xlu0 %v180, 120
    %v183 = vpop.permute.xlu0 %182
    %v185 = vadd.f32 %v168, %v183
    %v186 = vtanh.pop %v185
    %v187 = vmul.f32 %v175, %v175
    %v188 = vmul.f32 %v187, -0.5
    %190 = vrot.lane.b32.xlu0 %v172, 120
    %v191 = vpop.permute.xlu0 %190
    %v193 = vsub.f32 %v188, %v191
    %v194 = vsub.f32 %v193, 0.9189385
    %v195 = vmul.f32 %v185, -2.0
    %v196 = vmax.f32 %v195, 0.0
    %v197 = vand.u32 2147483647, %v195
    %v198 = vsub.f32 0.0, %v197
    %v199 = vmul.f32 %v198, 1.442695
    %v200 = vpow.pop %v199
    %v201 = vadd.f32 %v200, 1.0
    %v202 = vlog2.pop %v201
    %v203 = vmul.f32 %v202, 0.6931472
    %v204 = vadd.f32 %v196, %v203
    %v205 = vsub.f32 0.6931472, %v185
    %v206 = vsub.f32 %v205, %v204
    %v207 = vmul.f32 %v206, 2.0
    %v208 = vsub.f32 %v194, %v207
    %vm209 = vcmask 64512
    %v210 = vsel %vm209, %v208, 0.0
    %211 = vadd.xlane.f32.xlu0 %v210
    %v212 = vpop.xlane.xlu0 %211
    %vm213 = vcmask 7168
    %214 = vst.msk [vmem:[%s9] sm:$0xff] %vm213, %v212
    %215 = vst.msk [vmem:[#allocation7] sm:$0xff] %vm209, %v186
    // Predicated region
    $region42: #{tpu_custom_call.1} parent=1 // pred_check
      _
    $region43: #{tpu_custom_call.1} parent=1 // pred_check_branch
      %217 = sbr.rel (0) target = $region45
    $region44: #{tpu_custom_call.1} parent=1 // pred_region
      %219 = vsyncadd [#allocation4], 0
      %s221 = sshll.u32 [#allocation7], 4
      %s222 = int_to_ptr.vmem [resolvable:$true] %s221
      %s223 = sshll.u32 %s8, 4
      %s224 = int_to_ptr.hbm [resolvable:$true] %s223
      %226 = dma.vmem_to_hbm [thread:$0]  %s222, 128, %s224, [#allocation4]
    $region45: #{tpu_custom_call.1} parent=1 // pred_fallthru
      _
    // Predicated region
    $region46: #{tpu_custom_call.1} parent=1 // pred_check
      _
    $region47: #{tpu_custom_call.1} parent=1 // pred_check_branch
      %228 = sbr.rel (0) target = $region49
    $region48: #{tpu_custom_call.1} parent=1 // pred_region
      _
    $region49: #{tpu_custom_call.1} parent=1 // pred_fallthru
      _
    // Predicated region
    $region50: #{tpu_custom_call.1} parent=1 // pred_check
      _
    $region51: #{tpu_custom_call.1} parent=1 // pred_check_branch
      %230 = sbr.rel (0) target = $region53
    $region52: #{tpu_custom_call.1} parent=1 // pred_region
      %232 = dma.done [#allocation4], 128
    $region53: #{tpu_custom_call.1} parent=1 // pred_fallthru
      _
    // Predicated region
    $region54: #{tpu_custom_call.1} parent=1 // pred_check
      _
    $region55: #{tpu_custom_call.1} parent=1 // pred_check_branch
      %234 = sbr.rel (0) target = $region57
    $region56: #{tpu_custom_call.1} parent=1 // pred_region
      _
    $region57: #{tpu_custom_call.1} parent=1 // pred_fallthru
      _
    %235 = vsyncpa [#allocation3], 1
    %236 = vsyncpa [#allocation6], 1
    %237 = vsyncpa [#allocation4], 1

</llo_original>
